<compile_context>
chip_gen: v7x
topology: tpu7x:2x2x1
jax: 0.10.0
libtpu: 0.0.40
codegen_flags: <defaults>
</compile_context>

<pallas_src>
import functools

import jax
import jax.numpy as jnp
from jax import lax
from jax.experimental import pallas as pl
from jax.experimental.pallas import tpu as pltpu

_EPS = 1e-5  # BatchNorm2d default eps


def _pick_tile(dim, target, align):
    """Largest multiple of `align` <= target that divides dim, else full dim."""
    if dim <= target or dim % align != 0:
        return dim
    t = (target // align) * align
    while dim % t != 0:
        t -= align
    return t


def _pool_kernel(x_ref, o_ref, *, inv_hw):
    """Global average pool.
       x_ref: (TILE_R, TILE_HW) slab of the flattened (N*C, H*W) input.
       o_ref: (TILE_R, 1) per-row mean; resident across the H*W grid axis."""
    j = pl.program_id(1)

    @pl.when(j == 0)
    def _():
        o_ref[...] = jnp.zeros_like(o_ref)

    o_ref[...] += jnp.sum(x_ref[...].astype(jnp.float32), axis=-1,
                          keepdims=True)

    @pl.when(j == pl.num_programs(1) - 1)
    def _():
        o_ref[...] = o_ref[...] * inv_hw


def _head_kernel(p_ref, w_ref, g_ref, b_ref, o_ref):
    """1x1 conv (no bias) + training-mode BatchNorm + ReLU on pooled features.
       p_ref: (N, Cin) pooled means; w_ref: (Cin, Cout) conv weight;
       g_ref/b_ref: (1, Cout) BN affine; o_ref: (N, Cout)."""
    y = jnp.dot(p_ref[...], w_ref[...], preferred_element_type=jnp.float32)
    n = y.shape[0]
    # Single-pass batch statistics (biased variance), f32 accumulation.
    mean = jnp.sum(y, axis=0, keepdims=True) * (1.0 / n)
    ex2 = jnp.sum(y * y, axis=0, keepdims=True) * (1.0 / n)
    var = jnp.maximum(ex2 - mean * mean, 0.0)
    y = (y - mean) * lax.rsqrt(var + _EPS)
    y = y * g_ref[...] + b_ref[...]
    o_ref[...] = jnp.maximum(y, 0.0).astype(o_ref.dtype)


@jax.jit
def global_avg_pool_forward(x_nchw, w_oihw, gamma, beta):
    """x_nchw: (N, Cin, H, W); w_oihw: (Cout, Cin, 1, 1). Returns (N, Cout, 1, 1)."""
    bs = x_nchw.shape[0]
    if bs == 1:                                   # PyTorch forward's bs==1 branch
        x_nchw = jnp.concatenate([x_nchw, x_nchw], axis=0)
    N, Cin, H, W = x_nchw.shape
    Cout = w_oihw.shape[0]
    HW = H * W
    NC = N * Cin

    # Free view: (N, C, H, W) -> (N*C, H*W); H*W lands on the lane axis.
    x2d = x_nchw.reshape(NC, HW).astype(jnp.float32)

    tile_r = _pick_tile(NC, 512, 8)
    tile_hw = _pick_tile(HW, 2048, 128)
    grid = (NC // tile_r, HW // tile_hw)

    pooled = pl.pallas_call(
        functools.partial(_pool_kernel, inv_hw=1.0 / HW),
        out_shape=jax.ShapeDtypeStruct((NC, 1), jnp.float32),
        grid=grid,
        in_specs=[pl.BlockSpec((tile_r, tile_hw), lambda i, j: (i, j))],
        out_specs=pl.BlockSpec((tile_r, 1), lambda i, j: (i, 0)),
        compiler_params=pltpu.CompilerParams(
            dimension_semantics=("parallel", "arbitrary")),
    )(x2d)

    pooled = pooled.reshape(N, Cin)
    w2 = jnp.transpose(w_oihw.reshape(Cout, Cin)).astype(jnp.float32)  # (Cin, Cout)
    g2 = gamma.reshape(1, Cout).astype(jnp.float32)
    b2 = beta.reshape(1, Cout).astype(jnp.float32)

    out = pl.pallas_call(
        _head_kernel,
        out_shape=jax.ShapeDtypeStruct((N, Cout), jnp.float32),
        grid=(1,),
        in_specs=[
            pl.BlockSpec((N, Cin), lambda i: (0, 0)),
            pl.BlockSpec((Cin, Cout), lambda i: (0, 0)),
            pl.BlockSpec((1, Cout), lambda i: (0, 0)),
            pl.BlockSpec((1, Cout), lambda i: (0, 0)),
        ],
        out_specs=pl.BlockSpec((N, Cout), lambda i: (0, 0)),
        compiler_params=pltpu.CompilerParams(
            dimension_semantics=("arbitrary",)),
    )(pooled, w2, g2, b2)

    out = out.reshape(N, Cout, 1, 1)
    if bs == 1:
        out = out[:1]
    return out


def _reference(x, w_oihw, gamma, beta):
    """Pure-JAX reference matching the PyTorch GlobalAvgPool forward (train)."""
    bs = x.shape[0]
    if bs == 1:
        x = jnp.concatenate([x, x], axis=0)
    pooled = jnp.mean(x, axis=(2, 3), keepdims=True)               # (N, Cin, 1, 1)
    w2 = w_oihw.reshape(w_oihw.shape[0], w_oihw.shape[1])          # (Cout, Cin)
    y = jnp.einsum('nchw,oc->nohw', pooled, w2, precision='highest')
    mean = jnp.mean(y, axis=(0, 2, 3), keepdims=True)
    var = jnp.mean((y - mean) ** 2, axis=(0, 2, 3), keepdims=True)
    y = (y - mean) * lax.rsqrt(var + _EPS)
    y = y * gamma[None, :, None, None] + beta[None, :, None, None]
    y = jnp.maximum(y, 0.0)
    if bs == 1:
        y = y[:1]
    return y


if __name__ == "__main__":
    key = jax.random.PRNGKey(0)
    k_x, k_w, k_g, k_b, k_x1 = jax.random.split(key, 5)

    N, Cin, H, W, Cout = 2, 4, 16, 16, 8
    x = jax.random.normal(k_x, (N, Cin, H, W), dtype=jnp.float32)

    # Parameters: nn.Conv2d(in_ch, out_ch, 1, bias=False) + BatchNorm2d affine.
    bound = 1.0 / (Cin ** 0.5)
    w = jax.random.uniform(k_w, (Cout, Cin, 1, 1), jnp.float32, -bound, bound)
    gamma = 1.0 + 0.1 * jax.random.normal(k_g, (Cout,), jnp.float32)
    beta = 0.1 * jax.random.normal(k_b, (Cout,), jnp.float32)

    out = jax.block_until_ready(global_avg_pool_forward(x, w, gamma, beta))
    ref = _reference(x, w, gamma, beta)
    assert out.shape == (N, Cout, 1, 1)
    assert jnp.allclose(out, ref, rtol=2e-4, atol=2e-4), (
        float(jnp.max(jnp.abs(out - ref))))

    # Also exercise the bs == 1 branch (duplicate batch, slice back).
    x1 = jax.random.normal(k_x1, (1, Cin, H, W), dtype=jnp.float32)
    out1 = jax.block_until_ready(global_avg_pool_forward(x1, w, gamma, beta))
    ref1 = _reference(x1, w, gamma, beta)
    assert out1.shape == (1, Cout, 1, 1)
    assert jnp.allclose(out1, ref1, rtol=2e-4, atol=2e-4), (
        float(jnp.max(jnp.abs(out1 - ref1))))

    print("KERNEL_OK")
</pallas_src>

<mosaic_0001>
module attributes {stable_mosaic.version = 11 : i64} {
  func.func @_pool_kernel(%arg0: i32, %arg1: i32, %arg2: memref<8x256xf32, #tpu.memory_space<vmem>>, %arg3: memref<8x1xf32, #tpu.memory_space<vmem>>) attributes {dimension_semantics = [#tpu.dimension_semantics<parallel>, #tpu.dimension_semantics<arbitrary>], iteration_bounds = array<i64: 1, 1>, scalar_prefetch = 0 : i64, scratch_operands = 0 : i64, tpu.core_type = #tpu.core_type<tc>, window_params = [{transform_indices = @transform_0, window_bounds = array<i64: 8, 256>}, {transform_indices = @transform_1, window_bounds = array<i64: 8, 1>}]} {
    %c0_i32 = arith.constant 0 : i32
    %0 = arith.cmpi eq, %arg1, %c0_i32 : i32
    %1 = arith.extui %0 : i1 to i32
    %c0_i32_0 = arith.constant 0 : i32
    %2 = arith.cmpi ne, %1, %c0_i32_0 : i32
    scf.if %2 {
      %cst_8 = arith.constant 0.000000e+00 : f32
      %12 = vector.broadcast %cst_8 : f32 to vector<8x1xf32>
      %c0_9 = arith.constant 0 : index
      %c0_10 = arith.constant 0 : index
      %13 = vector.load %arg3[%c0_9, %c0_10] : memref<8x1xf32, #tpu.memory_space<vmem>>, vector<8x1xf32>
      tpu.vector_store %arg3[%c0_9, %c0_10], %12 {strides = array<i32>} : memref<8x1xf32, #tpu.memory_space<vmem>>, vector<8x1xf32>,
    } else {
    }
    %c0 = arith.constant 0 : index
    %c0_1 = arith.constant 0 : index
    %3 = vector.load %arg3[%c0, %c0_1] : memref<8x1xf32, #tpu.memory_space<vmem>>, vector<8x1xf32>
    %c0_2 = arith.constant 0 : index
    %c0_3 = arith.constant 0 : index
    %4 = vector.load %arg2[%c0_2, %c0_3] : memref<8x256xf32, #tpu.memory_space<vmem>>, vector<8x256xf32>
    %cst = arith.constant dense<0.000000e+00> : vector<8xf32>
    %5 = vector.multi_reduction <add>, %4, %cst [1] : vector<8x256xf32> to vector<8xf32>
    %6 = vector.shape_cast %5 : vector<8xf32> to vector<8x1xf32>
    %7 = arith.addf %3, %6 : vector<8x1xf32>
    %c0_4 = arith.constant 0 : index
    %c0_5 = arith.constant 0 : index
    %8 = vector.load %arg3[%c0_4, %c0_5] : memref<8x1xf32, #tpu.memory_space<vmem>>, vector<8x1xf32>
    tpu.vector_store %arg3[%c0_4, %c0_5], %7 {strides = array<i32>} : memref<8x1xf32, #tpu.memory_space<vmem>>, vector<8x1xf32>,
    %c0_i32_6 = arith.constant 0 : i32
    %9 = arith.cmpi eq, %arg1, %c0_i32_6 : i32
    %10 = arith.extui %9 : i1 to i32
    %c0_i32_7 = arith.constant 0 : i32
    %11 = arith.cmpi ne, %10, %c0_i32_7 : i32
    scf.if %11 {
      %c0_8 = arith.constant 0 : index
      %c0_9 = arith.constant 0 : index
      %12 = vector.load %arg3[%c0_8, %c0_9] : memref<8x1xf32, #tpu.memory_space<vmem>>, vector<8x1xf32>
      %cst_10 = arith.constant 3.906250e-03 : f32
      %13 = vector.broadcast %cst_10 : f32 to vector<8x1xf32>
      %14 = arith.mulf %12, %13 : vector<8x1xf32>
      %c0_11 = arith.constant 0 : index
      %c0_12 = arith.constant 0 : index
      %15 = vector.load %arg3[%c0_11, %c0_12] : memref<8x1xf32, #tpu.memory_space<vmem>>, vector<8x1xf32>
      tpu.vector_store %arg3[%c0_11, %c0_12], %14 {strides = array<i32>} : memref<8x1xf32, #tpu.memory_space<vmem>>, vector<8x1xf32>,
    } else {
    }
    return
  }
  func.func @transform_0(%arg0: i32, %arg1: i32) -> (i32, i32) {
    %c0_i32 = arith.constant 0 : i32
    return %arg0, %arg1 : i32, i32
  }
  func.func @transform_1(%arg0: i32, %arg1: i32) -> (i32, i32) {
    %c0_i32 = arith.constant 0 : i32
    %c0_i32_0 = arith.constant 0 : i32
    return %arg0, %c0_i32 : i32, i32
  }
}

module attributes {stable_mosaic.version = 11 : i64} {
  func.func @_head_kernel(%arg0: i32, %arg1: memref<2x4xf32, #tpu.memory_space<vmem>>, %arg2: memref<4x8xf32, #tpu.memory_space<vmem>>, %arg3: memref<1x8xf32, #tpu.memory_space<vmem>>, %arg4: memref<1x8xf32, #tpu.memory_space<vmem>>, %arg5: memref<2x8xf32, #tpu.memory_space<vmem>>) attributes {dimension_semantics = [#tpu.dimension_semantics<arbitrary>], iteration_bounds = array<i64: 1>, scalar_prefetch = 0 : i64, scratch_operands = 0 : i64, tpu.core_type = #tpu.core_type<tc>, window_params = [{pipeline_mode = #tpu.pipeline_mode<synchronous>, transform_indices = @transform_0, window_bounds = array<i64: 2, 4>}, {pipeline_mode = #tpu.pipeline_mode<synchronous>, transform_indices = @transform_1, window_bounds = array<i64: 4, 8>}, {pipeline_mode = #tpu.pipeline_mode<synchronous>, transform_indices = @transform_2, window_bounds = array<i64: 1, 8>}, {pipeline_mode = #tpu.pipeline_mode<synchronous>, transform_indices = @transform_3, window_bounds = array<i64: 1, 8>}, {pipeline_mode = #tpu.pipeline_mode<synchronous>, transform_indices = @transform_4, window_bounds = array<i64: 2, 8>}]} {
    %c0 = arith.constant 0 : index
    %c0_0 = arith.constant 0 : index
    %0 = vector.load %arg1[%c0, %c0_0] : memref<2x4xf32, #tpu.memory_space<vmem>>, vector<2x4xf32>
    %c0_1 = arith.constant 0 : index
    %c0_2 = arith.constant 0 : index
    %1 = vector.load %arg2[%c0_1, %c0_2] : memref<4x8xf32, #tpu.memory_space<vmem>>, vector<4x8xf32>
    %cst = arith.constant dense<0.000000e+00> : vector<2x8xf32>
    %2 = tpu.matmul %0, %1, %cst {dimension_numbers = #tpu.dot_dimension_numbers<[1], [0], [0], [1], [0, 0, 1, 1], [], []>} : vector<2x4xf32>, vector<4x8xf32>, vector<2x8xf32> -> vector<2x8xf32>
    %cst_3 = arith.constant dense<0.000000e+00> : vector<8xf32>
    %3 = vector.multi_reduction <add>, %2, %cst_3 [0] : vector<2x8xf32> to vector<8xf32>
    %4 = vector.shape_cast %3 : vector<8xf32> to vector<1x8xf32>
    %cst_4 = arith.constant 5.000000e-01 : f32
    %5 = vector.broadcast %cst_4 : f32 to vector<1x8xf32>
    %6 = arith.mulf %4, %5 : vector<1x8xf32>
    %7 = arith.mulf %2, %2 : vector<2x8xf32>
    %cst_5 = arith.constant dense<0.000000e+00> : vector<8xf32>
    %8 = vector.multi_reduction <add>, %7, %cst_5 [0] : vector<2x8xf32> to vector<8xf32>
    %9 = vector.shape_cast %8 : vector<8xf32> to vector<1x8xf32>
    %cst_6 = arith.constant 5.000000e-01 : f32
    %10 = vector.broadcast %cst_6 : f32 to vector<1x8xf32>
    %11 = arith.mulf %9, %10 : vector<1x8xf32>
    %12 = arith.mulf %6, %6 : vector<1x8xf32>
    %13 = arith.subf %11, %12 : vector<1x8xf32>
    %cst_7 = arith.constant 0.000000e+00 : f32
    %14 = vector.broadcast %cst_7 : f32 to vector<1x8xf32>
    %15 = arith.maximumf %13, %14 : vector<1x8xf32>
    %16 = vector.broadcast %6 : vector<1x8xf32> to vector<2x8xf32>
    %17 = arith.subf %2, %16 : vector<2x8xf32>
    %cst_8 = arith.constant 9.99999974E-6 : f32
    %18 = vector.broadcast %cst_8 : f32 to vector<1x8xf32>
    %19 = arith.addf %15, %18 : vector<1x8xf32>
    %20 = math.rsqrt %19 : vector<1x8xf32>
    %21 = vector.broadcast %20 : vector<1x8xf32> to vector<2x8xf32>
    %22 = arith.mulf %17, %21 : vector<2x8xf32>
    %c0_9 = arith.constant 0 : index
    %c0_10 = arith.constant 0 : index
    %23 = vector.load %arg3[%c0_9, %c0_10] : memref<1x8xf32, #tpu.memory_space<vmem>>, vector<1x8xf32>
    %24 = vector.broadcast %23 : vector<1x8xf32> to vector<2x8xf32>
    %25 = arith.mulf %22, %24 : vector<2x8xf32>
    %c0_11 = arith.constant 0 : index
    %c0_12 = arith.constant 0 : index
    %26 = vector.load %arg4[%c0_11, %c0_12] : memref<1x8xf32, #tpu.memory_space<vmem>>, vector<1x8xf32>
    %27 = vector.broadcast %26 : vector<1x8xf32> to vector<2x8xf32>
    %28 = arith.addf %25, %27 : vector<2x8xf32>
    %cst_13 = arith.constant 0.000000e+00 : f32
    %29 = vector.broadcast %cst_13 : f32 to vector<2x8xf32>
    %30 = arith.maximumf %28, %29 : vector<2x8xf32>
    %c0_14 = arith.constant 0 : index
    %c0_15 = arith.constant 0 : index
    %31 = vector.load %arg5[%c0_14, %c0_15] : memref<2x8xf32, #tpu.memory_space<vmem>>, vector<2x8xf32>
    tpu.vector_store %arg5[%c0_14, %c0_15], %30 {strides = array<i32>} : memref<2x8xf32, #tpu.memory_space<vmem>>, vector<2x8xf32>,
    return
  }
  func.func @transform_0(%arg0: i32) -> (i32, i32) {
    %c0_i32 = arith.constant 0 : i32
    %c0_i32_0 = arith.constant 0 : i32
    %c0_i32_1 = arith.constant 0 : i32
    return %c0_i32, %c0_i32_0 : i32, i32
  }
  func.func @transform_1(%arg0: i32) -> (i32, i32) {
    %c0_i32 = arith.constant 0 : i32
    %c0_i32_0 = arith.constant 0 : i32
    %c0_i32_1 = arith.constant 0 : i32
    return %c0_i32, %c0_i32_0 : i32, i32
  }
  func.func @transform_2(%arg0: i32) -> (i32, i32) {
    %c0_i32 = arith.constant 0 : i32
    %c0_i32_0 = arith.constant 0 : i32
    %c0_i32_1 = arith.constant 0 : i32
    return %c0_i32, %c0_i32_0 : i32, i32
  }
  func.func @transform_3(%arg0: i32) -> (i32, i32) {
    %c0_i32 = arith.constant 0 : i32
    %c0_i32_0 = arith.constant 0 : i32
    %c0_i32_1 = arith.constant 0 : i32
    return %c0_i32, %c0_i32_0 : i32, i32
  }
  func.func @transform_4(%arg0: i32) -> (i32, i32) {
    %c0_i32 = arith.constant 0 : i32
    %c0_i32_0 = arith.constant 0 : i32
    %c0_i32_1 = arith.constant 0 : i32
    return %c0_i32, %c0_i32_0 : i32, i32
  }
}

</mosaic_0001>

<llo_original>
// kernel: global_avg_pool_forward.2
$region0: #{global_avg_pool_forward.2}
  #allocation0 [shape = 'u32[]', space=smem, size = 0x4, offset = 0x4, fixed_abs, tag = 'smem constant byte address 0x4 - core index']
  #allocation1 [shape = 'u32[144,128]{1,0:T(1,128)}', space=vmem, size = 0x12000, scoped, tag = 'internal scratch']
  %s0 = inlined_call_operand.vmem [shape: f32[8,256], index: 0, kind: input, shape index: {}]
  %s1 = inlined_call_operand.vmem [shape: f32[8,1], index: 1, kind: output, shape index: {}]
  %s2 = sld [smem:[#allocation0]]
  $region22: #{global_avg_pool_forward.2} parent=0
    _
  %s4 = ssub.s32 1, %s2
  %s5 = scalar_select 0, %s4, %s2
  // Predicated region
  $region2: #{global_avg_pool_forward.2} parent=0 // pred_check
    _
  $region3: #{global_avg_pool_forward.2} parent=0 // pred_check_branch
    %7 = sbr.rel (0) target = $region5
  $region4: #{global_avg_pool_forward.2} parent=0 // pred_region
    _
  $region5: #{global_avg_pool_forward.2} parent=0 // pred_fallthru
    _
  %p8 = scmp.eq.s32.totalorder 0, 0
  // Predicated region
  $region6: #{global_avg_pool_forward.2} parent=0 // pred_check
    %p9 = pneg %p8
  $region7: #{global_avg_pool_forward.2} parent=0 // pred_check_branch
    %11 = sbr.rel (%p9) target = $region9
  $region8: #{global_avg_pool_forward.2} parent=0 // pred_region
    %vm12 = vcmask 7168
    %13 = vst.msk [vmem:[%s1] sm:$0xff] %vm12, 0.0
  $region9: #{global_avg_pool_forward.2} parent=0 // pred_fallthru
    _
  %v14 = vld [vmem:[%s1] sm:$0xff]
  %v15 = vld [vmem:[%s0] sm:$0xff]
  %v16 = vld [vmem:[%s0 + $0x8] sm:$0xff]
  %v17 = vadd.f32 %v15, %v16
  %18 = vadd.xlane.f32.xlu0 %v17
  %v19 = vpop.xlane.xlu0 %18
  %v20 = vadd.f32 %v14, %v19
  %vm21 = vcmask 7168
  %22 = vst.msk [vmem:[%s1] sm:$0xff] %vm21, %v20
  // Predicated region
  $region10: #{global_avg_pool_forward.2} parent=0 // pred_check
    %p23 = pneg %p8
  $region11: #{global_avg_pool_forward.2} parent=0 // pred_check_branch
    %25 = sbr.rel (%p23) target = $region13
  $region12: #{global_avg_pool_forward.2} parent=0 // pred_region
    %v26 = vld [vmem:[%s1] sm:$0xff]
    %v27 = vmul.f32 %v26, 0.00390625
    %28 = vst.msk [vmem:[%s1] sm:$0xff] %vm21, %v27
  $region13: #{global_avg_pool_forward.2} parent=0 // pred_fallthru
    _
  // Predicated region
  $region14: #{global_avg_pool_forward.2} parent=0 // pred_check
    _
  $region15: #{global_avg_pool_forward.2} parent=0 // pred_check_branch
    %30 = sbr.rel (0) target = $region17
  $region16: #{global_avg_pool_forward.2} parent=0 // pred_region
    _
  $region17: #{global_avg_pool_forward.2} parent=0 // pred_fallthru
    _
  // Predicated region
  $region18: #{global_avg_pool_forward.2} parent=0 // pred_check
    _
  $region19: #{global_avg_pool_forward.2} parent=0 // pred_check_branch
    %32 = sbr.rel (0) target = $region21
  $region20: #{global_avg_pool_forward.2} parent=0 // pred_region
    _
  $region21: #{global_avg_pool_forward.2} parent=0 // pred_fallthru
    _

// kernel: global_avg_pool_forward.3
$region0: #{global_avg_pool_forward.3}
  #allocation0 [shape = 'u32[]', space=smem, size = 0x4, offset = 0x4, fixed_abs, tag = 'smem constant byte address 0x4 - core index']
  #allocation1 [shape = 'u32[144,128]{1,0:T(1,128)}', space=vmem, size = 0x12000, scoped, tag = 'internal scratch']
  %s0 = inlined_call_operand.vmem [shape: f32[2,4], index: 0, kind: input, shape index: {}]
  %s1 = inlined_call_operand.vmem [shape: f32[4,8], index: 1, kind: input, shape index: {}]
  %s2 = inlined_call_operand.vmem [shape: f32[1,8], index: 2, kind: input, shape index: {}]
  %s3 = inlined_call_operand.vmem [shape: f32[1,8], index: 3, kind: input, shape index: {}]
  %s4 = inlined_call_operand.hbm [shape: f32[2,8], index: 4, kind: output, shape index: {}]
  %s5 = sld [smem:[#allocation0]]
  $region26: #{global_avg_pool_forward.3} parent=0
    _
  %s7 = ssub.s32 1, %s5
  %s8 = scalar_select 0, %s7, %s5
  $region1: #{global_avg_pool_forward.3} parent=0
    #allocation2 [shape = 'u8[1024]{0}', space=vmem, size = 0x400, scoped, tag = 'output window, operand 0, single buffered']
    #allocation3 [shape = 's32[1]{0}', space=sflag, size = 0x4, scoped, tag = 'scoped memory for global_avg_pool_forward.3']
    %9 = vsyncpa [#allocation3], 0
    // Predicated region
    $region2: #{global_avg_pool_forward.3} parent=1 // pred_check
      _
    $region3: #{global_avg_pool_forward.3} parent=1 // pred_check_branch
      %11 = sbr.rel (0) target = $region5
    $region4: #{global_avg_pool_forward.3} parent=1 // pred_region
      _
    $region5: #{global_avg_pool_forward.3} parent=1 // pred_fallthru
      _
    // Predicated region
    $region6: #{global_avg_pool_forward.3} parent=1 // pred_check
      _
    $region7: #{global_avg_pool_forward.3} parent=1 // pred_check_branch
      %13 = sbr.rel (0) target = $region9
    $region8: #{global_avg_pool_forward.3} parent=1 // pred_region
      _
    $region9: #{global_avg_pool_forward.3} parent=1 // pred_fallthru
      _
    // Predicated region
    $region10: #{global_avg_pool_forward.3} parent=1 // pred_check
      _
    $region11: #{global_avg_pool_forward.3} parent=1 // pred_check_branch
      %15 = sbr.rel (0) target = $region13
    $region12: #{global_avg_pool_forward.3} parent=1 // pred_region
      _
    $region13: #{global_avg_pool_forward.3} parent=1 // pred_fallthru
      _
    // Predicated region
    $region14: #{global_avg_pool_forward.3} parent=1 // pred_check
      _
    $region15: #{global_avg_pool_forward.3} parent=1 // pred_check_branch
      %17 = sbr.rel (0) target = $region17
    $region16: #{global_avg_pool_forward.3} parent=1 // pred_region
      _
    $region17: #{global_avg_pool_forward.3} parent=1 // pred_fallthru
      _
    %v18 = vld [vmem:[%s0] sm:$0x3]
    %v19 = vld [vmem:[%s1] sm:$0xf]
    %vm20 = vcmask 31744
    %v22 = vsel %vm20, %v18, 0
    %vm24 = vcmask 1043456
    %v26 = vsel %vm24, %v19, 0
    %28 = vmatprep.subr.mxu0 0.0
    %29 = vmatpush1.msra.mxu0 %v26
    %30 = vmatprep.subr.mxu0 0.0
    %31 = vmatpush1.msra.mxu0 0.0
    %32 = vmatprep.subr.mxu0 0.0
    %33 = vmatpush1.msra.mxu0 0.0
    %34 = vmatprep.subr.mxu0 0.0
    %35 = vmatpush1.msra.mxu0 0.0
    %36 = vmatprep.subr.mxu0 0.0
    %37 = vmatpush1.msra.mxu0 0.0
    %38 = vmatprep.subr.mxu0 0.0
    %39 = vmatpush1.msra.mxu0 0.0
    %40 = vmatprep.subr.mxu0 0.0
    %41 = vmatpush1.msra.mxu0 0.0
    %42 = vmatprep.subr.mxu0 0.0
    %43 = vmatpush1.msra.mxu0 0.0
    %44 = vmatprep.subr.mxu0 0.0
    %45 = vmatpush1.msra.mxu0 0.0
    %46 = vmatprep.subr.mxu0 0.0
    %47 = vmatpush1.msra.mxu0 0.0
    %48 = vmatprep.subr.mxu0 0.0
    %49 = vmatpush1.msra.mxu0 0.0
    %50 = vmatprep.subr.mxu0 0.0
    %51 = vmatpush1.msra.mxu0 0.0
    %52 = vmatprep.subr.mxu0 0.0
    %53 = vmatpush1.msra.mxu0 0.0
    %54 = vmatprep.subr.mxu0 0.0
    %55 = vmatpush1.msra.mxu0 0.0
    %56 = vmatprep.subr.mxu0 0.0
    %57 = vmatpush1.msra.mxu0 0.0
    %58 = vmatprep.subr.mxu0 0.0
    %59 = vmatpush1.msra.mxu0 0.0
    %60 = vmatprep.subr.mxu0 0.0
    %61 = vmatpush1.msra.mxu0 0.0
    %62 = vmatprep.subr.mxu0 0.0
    %63 = vmatpush1.msra.mxu0 0.0
    %64 = vmatprep.subr.mxu0 0.0
    %65 = vmatpush1.msra.mxu0 0.0
    %66 = vmatprep.subr.mxu0 0.0
    %67 = vmatpush1.msra.mxu0 0.0
    %68 = vmatprep.subr.mxu0 0.0
    %69 = vmatpush1.msra.mxu0 0.0
    %70 = vmatprep.subr.mxu0 0.0
    %71 = vmatpush1.msra.mxu0 0.0
    %72 = vmatprep.subr.mxu0 0.0
    %73 = vmatpush1.msra.mxu0 0.0
    %74 = vmatprep.subr.mxu0 0.0
    %75 = vmatpush1.msra.mxu0 0.0
    %76 = vmatprep.subr.mxu0 0.0
    %77 = vmatpush1.msra.mxu0 0.0
    %78 = vmatprep.subr.mxu0 0.0
    %79 = vmatpush1.msra.mxu0 0.0
    %80 = vmatprep.subr.mxu0 0.0
    %81 = vmatpush1.msra.mxu0 0.0
    %82 = vmatprep.subr.mxu0 0.0
    %83 = vmatpush1.msra.mxu0 0.0
    %84 = vmatprep.subr.mxu0 0.0
    %85 = vmatpush1.msra.mxu0 0.0
    %86 = vmatprep.subr.mxu0 0.0
    %87 = vmatpush1.msra.mxu0 0.0
    %88 = vmatprep.subr.mxu0 0.0
    %89 = vmatpush1.msra.mxu0 0.0
    %90 = vmatprep.subr.mxu0 0.0
    %91 = vmatpush1.msra.mxu0 0.0
    %92 = vmatprep.mubr.f32.mxu0 0.0
    %93 = vmatmul.mubr.f32.gmra.mrb[0].mxu0 %v22
    %v94 = vpop.f32.mrb[0].mxu0
    %v95 = vadd.f32 0.0, %v94
    %v96 = vpop.f32.mrb[0].mxu0
    %97 = vdwg.mxu0
    %vm98 = vcmask 58368
    %v99 = vsel %vm98, %v95, 0.0
    %v100 = vrot.slane %v99, 4
    %v101 = vadd.f32 %v99, %v100
    %v102 = vrot.slane %v101, 2
    %v103 = vadd.f32 %v101, %v102
    %v104 = vrot.slane %v103, 1
    %v105 = vadd.f32 %v103, %v104
    %v106 = vmul.f32 %v105, 0.5
    %v107 = vmul.f32 %v95, %v95
    %v108 = vsel %vm98, %v107, 0.0
    %v109 = vrot.slane %v108, 4
    %v110 = vadd.f32 %v108, %v109
    %v111 = vrot.slane %v110, 2
    %v112 = vadd.f32 %v110, %v111
    %v113 = vrot.slane %v112, 1
    %v114 = vadd.f32 %v112, %v113
    %v115 = vmul.f32 %v114, 0.5
    %v116 = vmul.f32 %v106, %v106
    %v117 = vsub.f32 %v115, %v116
    %v118 = vmax.f32 %v117, 0.0
    %v119 = vsub.f32 %v95, %v106
    %v120 = vadd.f32 %v118, 1e-05
    %v121 = vrsqrt.pop %v120
    %v122 = vmul.f32 %v119, %v121
    %v123 = vld [vmem:[%s2] sm:$0x1]
    %v125 = vlaneseq
    %v126 = vshrl.u32 %v125, 7
    %v127 = vsub.s32 0, %v126
    %v128 = vrot.slane %v123, %v127
    %v130 = vmul.f32 %v122, %v128
    %v131 = vld [vmem:[%s3] sm:$0x1]
    %v133 = vlaneseq
    %v134 = vshrl.u32 %v133, 7
    %v135 = vsub.s32 0, %v134
    %v136 = vrot.slane %v131, %v135
    %v138 = vadd.f32 %v130, %v136
    %v139 = vmax.f32 %v138, 0.0
    %140 = vst.msk [vmem:[#allocation2] sm:$0x3] %vm98, %v139
    // Predicated region
    $region18: #{global_avg_pool_forward.3} parent=1 // pred_check
      _
    $region19: #{global_avg_pool_forward.3} parent=1 // pred_check_branch
      %142 = sbr.rel (0) target = $region21
    $region20: #{global_avg_pool_forward.3} parent=1 // pred_region
      %s144 = ssub.s32 32, 32
      %145 = vsyncadd [#allocation3], %s144
      %s147 = sshll.u32 [#allocation2], 4
      %s148 = int_to_ptr.vmem [resolvable:$true] %s147
      %150 = dma.vmem_to_hbm [thread:$0]  %s148, 32, %s4, [#allocation3]
    $region21: #{global_avg_pool_forward.3} parent=1 // pred_fallthru
      _
    // Predicated region
    $region22: #{global_avg_pool_forward.3} parent=1 // pred_check
      _
    $region23: #{global_avg_pool_forward.3} parent=1 // pred_check_branch
      %152 = sbr.rel (0) target = $region25
    $region24: #{global_avg_pool_forward.3} parent=1 // pred_region
      %153 = dma.done [#allocation3], 32
    $region25: #{global_avg_pool_forward.3} parent=1 // pred_fallthru
      _
    %154 = vsyncpa [#allocation3], 1

</llo_original>
